<compile_context>
chip_gen: v5e
topology: v5e:2x2
jax: 0.10.0
libtpu: 0.0.40
codegen_flags: <defaults>
</compile_context>

<pallas_src>
import functools

import jax
import jax.numpy as jnp
from jax.experimental import pallas as pl
from jax.experimental.pallas import tpu as pltpu


_BN_EPS = 1e-5
_THRESH = 1.0  # snn.Leaky default threshold


def _vmem():
    return pl.BlockSpec(memory_space=pltpu.MemorySpace.VMEM)


# --------------------------- fused forward kernel -----------------------------------------

def _fused_forward_kernel(n_batch,
                          p1e_ref, p1o_ref,          # conv1 im2col patches (even/odd outputs)
                          w1_ref, bn1g_ref, bn1b_ref,
                          w2_ref, bn2g_ref, bn2b_ref,
                          wfc_ref, bfc_ref,
                          spk_ref, mem_ref):
    L1h = p1e_ref.shape[0] // n_batch      # half of conv1 output length (25)
    L2 = L1h                               # conv2 output length (25)
    C1 = w1_ref.shape[1]                   # 8
    C2 = w2_ref.shape[2]                   # 16
    K2 = w2_ref.shape[0]                   # 5

    # ---- conv1 (1->8, k=7, s=2, p=3): one matmul per output-parity phase -----------------
    w1 = w1_ref[...]                                                     # (7, C1)
    y1e = jnp.dot(p1e_ref[...], w1, preferred_element_type=jnp.float32)  # (N*L1h, C1)
    y1o = jnp.dot(p1o_ref[...], w1, preferred_element_type=jnp.float32)

    # ---- BatchNorm1d #1: training-mode batch stats over N*L1, biased var, single pass ----
    cnt1 = float(n_batch * 2 * L1h)
    s1 = jnp.sum(y1e, axis=0, keepdims=True) + jnp.sum(y1o, axis=0, keepdims=True)
    q1 = jnp.sum(y1e * y1e, axis=0, keepdims=True) + jnp.sum(y1o * y1o, axis=0, keepdims=True)
    mean1 = s1 / cnt1
    var1 = q1 / cnt1 - mean1 * mean1
    inv1 = jax.lax.rsqrt(var1 + _BN_EPS) * bn1g_ref[...]
    sh1 = bn1b_ref[...] - mean1 * inv1
    # Leaky (zero state): mem = BN(y); spk = heaviside(mem - 1)
    spk1e = (y1e * inv1 + sh1 > _THRESH).astype(jnp.float32)             # (N*L1h, C1)
    spk1o = (y1o * inv1 + sh1 > _THRESH).astype(jnp.float32)

    # ---- conv2 (8->16, k=5, s=2, p=2): per-sample tap accumulation, all unit-stride ------
    w2_taps = [w2_ref[k] for k in range(K2)]                             # each (C1, C2)
    zrow = jnp.zeros((1, C1), jnp.float32)
    y2 = []
    for n in range(n_batch):
        e = jnp.concatenate([zrow, spk1e[n * L1h:(n + 1) * L1h, :], zrow], axis=0)  # (L1h+2, C1)
        o = jnp.concatenate([zrow, spk1o[n * L1h:(n + 1) * L1h, :], zrow], axis=0)
        # tap k touches conv1 position 2*t + k - 2 (even/odd phase, shifted):
        taps = (e[0:L2, :], o[0:L2, :], e[1:L2 + 1, :], o[1:L2 + 1, :], e[2:L2 + 2, :])
        acc = jnp.dot(taps[0], w2_taps[0], preferred_element_type=jnp.float32)      # (L2, C2)
        for k in range(1, K2):
            acc = acc + jnp.dot(taps[k], w2_taps[k], preferred_element_type=jnp.float32)
        y2.append(acc)

    # ---- BatchNorm1d #2: batch stats over N*L2 --------------------------------------------
    cnt2 = float(n_batch * L2)
    s2 = jnp.zeros((1, C2), jnp.float32)
    q2 = jnp.zeros((1, C2), jnp.float32)
    for n in range(n_batch):
        s2 = s2 + jnp.sum(y2[n], axis=0, keepdims=True)
        q2 = q2 + jnp.sum(y2[n] * y2[n], axis=0, keepdims=True)
    mean2 = s2 / cnt2
    var2 = q2 / cnt2 - mean2 * mean2
    inv2 = jax.lax.rsqrt(var2 + _BN_EPS) * bn2g_ref[...]
    sh2 = bn2b_ref[...] - mean2 * inv2

    # ---- spike #2 + (flatten folded into pre-permuted fc weight planes) + classifier ------
    w_out0 = wfc_ref[0]                                                  # (L2, C2)
    w_out1 = wfc_ref[1]
    z_rows = []
    for n in range(n_batch):
        spk2 = (y2[n] * inv2 + sh2 > _THRESH).astype(jnp.float32)        # (L2, C2)
        z0 = jnp.sum(spk2 * w_out0, keepdims=True)                       # (1, 1)
        z1 = jnp.sum(spk2 * w_out1, keepdims=True)
        z_rows.append(jnp.concatenate([z0, z1], axis=1))                 # (1, 2)
    z = jnp.concatenate(z_rows, axis=0) + bfc_ref[...]                   # (N, 2)

    # final Leaky (class_act, output=True): mem = z (pre-reset), spk = heaviside(z - 1)
    mem_ref[...] = z
    spk_ref[...] = (z > _THRESH).astype(jnp.float32)


# --------------------------- JAX wrapper (cheap static glue only) --------------------------

def spiking_densenet_forward(x_ncl, params):
    N, Cin, L = x_ncl.shape
    L1 = (L + 2 * 3 - 7) // 2 + 1          # conv1 output length
    L2 = (L1 + 2 * 2 - 5) // 2 + 1         # conv2 output length
    assert Cin == 1 and L1 % 2 == 0 and params["fc_w"].shape[1] == 16 * L2
    half = L1 // 2

    # phase-split im2col for conv1 (static strided slices + stack, no gather)
    x = x_ncl[:, 0, :]                                   # (N, L)
    xp = jnp.pad(x, ((0, 0), (3, 3)))                    # (N, L+6)
    p1e = jnp.stack([xp[:, k: k + 4 * half: 4] for k in range(7)], axis=-1)          # (N, half, 7)
    p1o = jnp.stack([xp[:, k + 2: k + 2 + 4 * half: 4] for k in range(7)], axis=-1)  # (N, half, 7)
    p1e = p1e.reshape(N * half, 7)
    p1o = p1o.reshape(N * half, 7)

    # weight pre-packing (constant-folded under jit): no in-kernel transposes
    w1p = jnp.transpose(params["conv1_w"][:, 0, :], (1, 0))             # (7, 8)   [tap, cout]
    w2p = jnp.transpose(params["conv2_w"], (2, 1, 0))                   # (5, 8, 16) [tap, cin, cout]
    # fold torch.flatten(NCL, 1) ordering into the classifier weight planes:
    wfcp = jnp.transpose(params["fc_w"].reshape(2, 16, L2), (0, 2, 1))  # (2, L2, 16) [out, pos, ch]
    bfc = params["fc_b"].reshape(1, 2)

    kernel = functools.partial(_fused_forward_kernel, N)
    spk, mem = pl.pallas_call(
        kernel,
        out_shape=(jax.ShapeDtypeStruct((N, 2), jnp.float32),
                   jax.ShapeDtypeStruct((N, 2), jnp.float32)),
        in_specs=[_vmem()] * 10,
        out_specs=(_vmem(), _vmem()),
    )(p1e, p1o, w1p, params["bn1_g"], params["bn1_b"],
      w2p, params["bn2_g"], params["bn2_b"], wfcp, bfc)
    return spk, mem


# --------------------------- deterministic parameter init ----------------------------------

def init_params(key):
    k1, k2, k3 = jax.random.split(key, 3)
    return {
        "conv1_w": jax.random.normal(k1, (8, 1, 7), jnp.float32) * 0.02,
        "bn1_g": jnp.ones((1, 8), jnp.float32),
        "bn1_b": jnp.zeros((1, 8), jnp.float32),
        "conv2_w": jax.random.normal(k2, (16, 8, 5), jnp.float32) * 0.02,
        "bn2_g": jnp.ones((1, 16), jnp.float32),
        "bn2_b": jnp.zeros((1, 16), jnp.float32),
        "fc_w": jax.random.normal(k3, (2, 400), jnp.float32) * 0.02,
        "fc_b": jnp.zeros((1, 2), jnp.float32),        # init_weights: bias = 0
    }


if __name__ == "__main__":
    key = jax.random.PRNGKey(0)
    pkey, xkey = jax.random.split(key)
    params = init_params(pkey)

    # Classifier expects 400 = 16 * 25 features => input length 100:
    # L=100 -> conv1(k7,s2,p3) -> 50 -> conv2(k5,s2,p2) -> 25.
    x = jax.random.normal(xkey, (2, 1, 100), jnp.float32)

    spk, mem = jax.jit(spiking_densenet_forward)(x, params)
    jax.block_until_ready((spk, mem))
    assert spk.shape == (2, 2) and mem.shape == (2, 2)
    print("KERNEL_OK")
</pallas_src>

<mosaic_0001>
module attributes {stable_mosaic.version = 11 : i64} {
  func.func @_fused_forward_kernel(%arg0: memref<50x7xf32, #tpu.memory_space<vmem>>, %arg1: memref<50x7xf32, #tpu.memory_space<vmem>>, %arg2: memref<7x8xf32, #tpu.memory_space<vmem>>, %arg3: memref<1x8xf32, #tpu.memory_space<vmem>>, %arg4: memref<1x8xf32, #tpu.memory_space<vmem>>, %arg5: memref<5x8x16xf32, #tpu.memory_space<vmem>>, %arg6: memref<1x16xf32, #tpu.memory_space<vmem>>, %arg7: memref<1x16xf32, #tpu.memory_space<vmem>>, %arg8: memref<2x25x16xf32, #tpu.memory_space<vmem>>, %arg9: memref<1x2xf32, #tpu.memory_space<vmem>>, %arg10: memref<2x2xf32, #tpu.memory_space<vmem>>, %arg11: memref<2x2xf32, #tpu.memory_space<vmem>>) attributes {dimension_semantics = [], scalar_prefetch = 0 : i64, scratch_operands = 0 : i64, tpu.core_type = #tpu.core_type<tc>} {
    %c0 = arith.constant 0 : index
    %c0_0 = arith.constant 0 : index
    %0 = vector.load %arg2[%c0, %c0_0] : memref<7x8xf32, #tpu.memory_space<vmem>>, vector<7x8xf32>
    %c0_1 = arith.constant 0 : index
    %c0_2 = arith.constant 0 : index
    %1 = vector.load %arg0[%c0_1, %c0_2] : memref<50x7xf32, #tpu.memory_space<vmem>>, vector<50x7xf32>
    %cst = arith.constant dense<0.000000e+00> : vector<50x8xf32>
    %2 = tpu.matmul %1, %0, %cst {dimension_numbers = #tpu.dot_dimension_numbers<[1], [0], [0], [1], [0, 0, 1, 1], [], []>} : vector<50x7xf32>, vector<7x8xf32>, vector<50x8xf32> -> vector<50x8xf32>
    %c0_3 = arith.constant 0 : index
    %c0_4 = arith.constant 0 : index
    %3 = vector.load %arg1[%c0_3, %c0_4] : memref<50x7xf32, #tpu.memory_space<vmem>>, vector<50x7xf32>
    %cst_5 = arith.constant dense<0.000000e+00> : vector<50x8xf32>
    %4 = tpu.matmul %3, %0, %cst_5 {dimension_numbers = #tpu.dot_dimension_numbers<[1], [0], [0], [1], [0, 0, 1, 1], [], []>} : vector<50x7xf32>, vector<7x8xf32>, vector<50x8xf32> -> vector<50x8xf32>
    %cst_6 = arith.constant dense<0.000000e+00> : vector<8xf32>
    %5 = vector.multi_reduction <add>, %2, %cst_6 [0] : vector<50x8xf32> to vector<8xf32>
    %6 = vector.shape_cast %5 : vector<8xf32> to vector<1x8xf32>
    %cst_7 = arith.constant dense<0.000000e+00> : vector<8xf32>
    %7 = vector.multi_reduction <add>, %4, %cst_7 [0] : vector<50x8xf32> to vector<8xf32>
    %8 = vector.shape_cast %7 : vector<8xf32> to vector<1x8xf32>
    %9 = arith.addf %6, %8 : vector<1x8xf32>
    %10 = arith.mulf %2, %2 : vector<50x8xf32>
    %cst_8 = arith.constant dense<0.000000e+00> : vector<8xf32>
    %11 = vector.multi_reduction <add>, %10, %cst_8 [0] : vector<50x8xf32> to vector<8xf32>
    %12 = vector.shape_cast %11 : vector<8xf32> to vector<1x8xf32>
    %13 = arith.mulf %4, %4 : vector<50x8xf32>
    %cst_9 = arith.constant dense<0.000000e+00> : vector<8xf32>
    %14 = vector.multi_reduction <add>, %13, %cst_9 [0] : vector<50x8xf32> to vector<8xf32>
    %15 = vector.shape_cast %14 : vector<8xf32> to vector<1x8xf32>
    %16 = arith.addf %12, %15 : vector<1x8xf32>
    %cst_10 = arith.constant 1.000000e+02 : f32
    %17 = vector.broadcast %cst_10 : f32 to vector<1x8xf32>
    %18 = arith.divf %9, %17 : vector<1x8xf32>
    %cst_11 = arith.constant 1.000000e+02 : f32
    %19 = vector.broadcast %cst_11 : f32 to vector<1x8xf32>
    %20 = arith.divf %16, %19 : vector<1x8xf32>
    %21 = arith.mulf %18, %18 : vector<1x8xf32>
    %22 = arith.subf %20, %21 : vector<1x8xf32>
    %cst_12 = arith.constant 9.99999974E-6 : f32
    %23 = vector.broadcast %cst_12 : f32 to vector<1x8xf32>
    %24 = arith.addf %22, %23 : vector<1x8xf32>
    %25 = math.rsqrt %24 : vector<1x8xf32>
    %c0_13 = arith.constant 0 : index
    %c0_14 = arith.constant 0 : index
    %26 = vector.load %arg3[%c0_13, %c0_14] : memref<1x8xf32, #tpu.memory_space<vmem>>, vector<1x8xf32>
    %27 = arith.mulf %25, %26 : vector<1x8xf32>
    %c0_15 = arith.constant 0 : index
    %c0_16 = arith.constant 0 : index
    %28 = vector.load %arg4[%c0_15, %c0_16] : memref<1x8xf32, #tpu.memory_space<vmem>>, vector<1x8xf32>
    %29 = arith.mulf %18, %27 : vector<1x8xf32>
    %30 = arith.subf %28, %29 : vector<1x8xf32>
    %31 = vector.broadcast %27 : vector<1x8xf32> to vector<50x8xf32>
    %32 = arith.mulf %2, %31 : vector<50x8xf32>
    %33 = vector.broadcast %30 : vector<1x8xf32> to vector<50x8xf32>
    %34 = arith.addf %32, %33 : vector<50x8xf32>
    %cst_17 = arith.constant 1.000000e+00 : f32
    %35 = vector.broadcast %cst_17 : f32 to vector<50x8xf32>
    %36 = arith.cmpf ogt, %34, %35 : vector<50x8xf32>
    %37 = arith.extui %36 : vector<50x8xi1> to vector<50x8xi32>
    %38 = arith.sitofp %37 : vector<50x8xi32> to vector<50x8xf32>
    %39 = vector.broadcast %27 : vector<1x8xf32> to vector<50x8xf32>
    %40 = arith.mulf %4, %39 : vector<50x8xf32>
    %41 = vector.broadcast %30 : vector<1x8xf32> to vector<50x8xf32>
    %42 = arith.addf %40, %41 : vector<50x8xf32>
    %cst_18 = arith.constant 1.000000e+00 : f32
    %43 = vector.broadcast %cst_18 : f32 to vector<50x8xf32>
    %44 = arith.cmpf ogt, %42, %43 : vector<50x8xf32>
    %45 = arith.extui %44 : vector<50x8xi1> to vector<50x8xi32>
    %46 = arith.sitofp %45 : vector<50x8xi32> to vector<50x8xf32>
    %c0_19 = arith.constant 0 : index
    %c0_20 = arith.constant 0 : index
    %c0_21 = arith.constant 0 : index
    %47 = vector.load %arg5[%c0_19, %c0_20, %c0_21] : memref<5x8x16xf32, #tpu.memory_space<vmem>>, vector<1x8x16xf32>
    %48 = vector.shape_cast %47 : vector<1x8x16xf32> to vector<8x16xf32>
    %c1 = arith.constant 1 : index
    %c0_22 = arith.constant 0 : index
    %c0_23 = arith.constant 0 : index
    %49 = vector.load %arg5[%c1, %c0_22, %c0_23] : memref<5x8x16xf32, #tpu.memory_space<vmem>>, vector<1x8x16xf32>
    %50 = vector.shape_cast %49 : vector<1x8x16xf32> to vector<8x16xf32>
    %c2 = arith.constant 2 : index
    %c0_24 = arith.constant 0 : index
    %c0_25 = arith.constant 0 : index
    %51 = vector.load %arg5[%c2, %c0_24, %c0_25] : memref<5x8x16xf32, #tpu.memory_space<vmem>>, vector<1x8x16xf32>
    %52 = vector.shape_cast %51 : vector<1x8x16xf32> to vector<8x16xf32>
    %c3 = arith.constant 3 : index
    %c0_26 = arith.constant 0 : index
    %c0_27 = arith.constant 0 : index
    %53 = vector.load %arg5[%c3, %c0_26, %c0_27] : memref<5x8x16xf32, #tpu.memory_space<vmem>>, vector<1x8x16xf32>
    %54 = vector.shape_cast %53 : vector<1x8x16xf32> to vector<8x16xf32>
    %c4 = arith.constant 4 : index
    %c0_28 = arith.constant 0 : index
    %c0_29 = arith.constant 0 : index
    %55 = vector.load %arg5[%c4, %c0_28, %c0_29] : memref<5x8x16xf32, #tpu.memory_space<vmem>>, vector<1x8x16xf32>
    %56 = vector.shape_cast %55 : vector<1x8x16xf32> to vector<8x16xf32>
    %cst_30 = arith.constant 0.000000e+00 : f32
    %57 = vector.broadcast %cst_30 : f32 to vector<1x8xf32>
    %58 = vector.extract_strided_slice %38 {offsets = [0, 0], sizes = [25, 8], strides = [1, 1]} : vector<50x8xf32> to vector<25x8xf32>
    %59 = tpu.concatenate %57, %58, %57 in 0 : vector<1x8xf32>, vector<25x8xf32>, vector<1x8xf32> -> vector<27x8xf32>
    %60 = vector.extract_strided_slice %46 {offsets = [0, 0], sizes = [25, 8], strides = [1, 1]} : vector<50x8xf32> to vector<25x8xf32>
    %61 = tpu.concatenate %57, %60, %57 in 0 : vector<1x8xf32>, vector<25x8xf32>, vector<1x8xf32> -> vector<27x8xf32>
    %62 = vector.extract_strided_slice %59 {offsets = [0, 0], sizes = [25, 8], strides = [1, 1]} : vector<27x8xf32> to vector<25x8xf32>
    %63 = vector.extract_strided_slice %61 {offsets = [0, 0], sizes = [25, 8], strides = [1, 1]} : vector<27x8xf32> to vector<25x8xf32>
    %64 = vector.extract_strided_slice %59 {offsets = [1, 0], sizes = [25, 8], strides = [1, 1]} : vector<27x8xf32> to vector<25x8xf32>
    %65 = vector.extract_strided_slice %61 {offsets = [1, 0], sizes = [25, 8], strides = [1, 1]} : vector<27x8xf32> to vector<25x8xf32>
    %66 = vector.extract_strided_slice %59 {offsets = [2, 0], sizes = [25, 8], strides = [1, 1]} : vector<27x8xf32> to vector<25x8xf32>
    %cst_31 = arith.constant dense<0.000000e+00> : vector<25x16xf32>
    %67 = tpu.matmul %62, %48, %cst_31 {dimension_numbers = #tpu.dot_dimension_numbers<[1], [0], [0], [1], [0, 0, 1, 1], [], []>} : vector<25x8xf32>, vector<8x16xf32>, vector<25x16xf32> -> vector<25x16xf32>
    %cst_32 = arith.constant dense<0.000000e+00> : vector<25x16xf32>
    %68 = tpu.matmul %63, %50, %cst_32 {dimension_numbers = #tpu.dot_dimension_numbers<[1], [0], [0], [1], [0, 0, 1, 1], [], []>} : vector<25x8xf32>, vector<8x16xf32>, vector<25x16xf32> -> vector<25x16xf32>
    %69 = arith.addf %67, %68 : vector<25x16xf32>
    %cst_33 = arith.constant dense<0.000000e+00> : vector<25x16xf32>
    %70 = tpu.matmul %64, %52, %cst_33 {dimension_numbers = #tpu.dot_dimension_numbers<[1], [0], [0], [1], [0, 0, 1, 1], [], []>} : vector<25x8xf32>, vector<8x16xf32>, vector<25x16xf32> -> vector<25x16xf32>
    %71 = arith.addf %69, %70 : vector<25x16xf32>
    %cst_34 = arith.constant dense<0.000000e+00> : vector<25x16xf32>
    %72 = tpu.matmul %65, %54, %cst_34 {dimension_numbers = #tpu.dot_dimension_numbers<[1], [0], [0], [1], [0, 0, 1, 1], [], []>} : vector<25x8xf32>, vector<8x16xf32>, vector<25x16xf32> -> vector<25x16xf32>
    %73 = arith.addf %71, %72 : vector<25x16xf32>
    %cst_35 = arith.constant dense<0.000000e+00> : vector<25x16xf32>
    %74 = tpu.matmul %66, %56, %cst_35 {dimension_numbers = #tpu.dot_dimension_numbers<[1], [0], [0], [1], [0, 0, 1, 1], [], []>} : vector<25x8xf32>, vector<8x16xf32>, vector<25x16xf32> -> vector<25x16xf32>
    %75 = arith.addf %73, %74 : vector<25x16xf32>
    %76 = vector.extract_strided_slice %38 {offsets = [25, 0], sizes = [25, 8], strides = [1, 1]} : vector<50x8xf32> to vector<25x8xf32>
    %77 = tpu.concatenate %57, %76, %57 in 0 : vector<1x8xf32>, vector<25x8xf32>, vector<1x8xf32> -> vector<27x8xf32>
    %78 = vector.extract_strided_slice %46 {offsets = [25, 0], sizes = [25, 8], strides = [1, 1]} : vector<50x8xf32> to vector<25x8xf32>
    %79 = tpu.concatenate %57, %78, %57 in 0 : vector<1x8xf32>, vector<25x8xf32>, vector<1x8xf32> -> vector<27x8xf32>
    %80 = vector.extract_strided_slice %77 {offsets = [0, 0], sizes = [25, 8], strides = [1, 1]} : vector<27x8xf32> to vector<25x8xf32>
    %81 = vector.extract_strided_slice %79 {offsets = [0, 0], sizes = [25, 8], strides = [1, 1]} : vector<27x8xf32> to vector<25x8xf32>
    %82 = vector.extract_strided_slice %77 {offsets = [1, 0], sizes = [25, 8], strides = [1, 1]} : vector<27x8xf32> to vector<25x8xf32>
    %83 = vector.extract_strided_slice %79 {offsets = [1, 0], sizes = [25, 8], strides = [1, 1]} : vector<27x8xf32> to vector<25x8xf32>
    %84 = vector.extract_strided_slice %77 {offsets = [2, 0], sizes = [25, 8], strides = [1, 1]} : vector<27x8xf32> to vector<25x8xf32>
    %cst_36 = arith.constant dense<0.000000e+00> : vector<25x16xf32>
    %85 = tpu.matmul %80, %48, %cst_36 {dimension_numbers = #tpu.dot_dimension_numbers<[1], [0], [0], [1], [0, 0, 1, 1], [], []>} : vector<25x8xf32>, vector<8x16xf32>, vector<25x16xf32> -> vector<25x16xf32>
    %cst_37 = arith.constant dense<0.000000e+00> : vector<25x16xf32>
    %86 = tpu.matmul %81, %50, %cst_37 {dimension_numbers = #tpu.dot_dimension_numbers<[1], [0], [0], [1], [0, 0, 1, 1], [], []>} : vector<25x8xf32>, vector<8x16xf32>, vector<25x16xf32> -> vector<25x16xf32>
    %87 = arith.addf %85, %86 : vector<25x16xf32>
    %cst_38 = arith.constant dense<0.000000e+00> : vector<25x16xf32>
    %88 = tpu.matmul %82, %52, %cst_38 {dimension_numbers = #tpu.dot_dimension_numbers<[1], [0], [0], [1], [0, 0, 1, 1], [], []>} : vector<25x8xf32>, vector<8x16xf32>, vector<25x16xf32> -> vector<25x16xf32>
    %89 = arith.addf %87, %88 : vector<25x16xf32>
    %cst_39 = arith.constant dense<0.000000e+00> : vector<25x16xf32>
    %90 = tpu.matmul %83, %54, %cst_39 {dimension_numbers = #tpu.dot_dimension_numbers<[1], [0], [0], [1], [0, 0, 1, 1], [], []>} : vector<25x8xf32>, vector<8x16xf32>, vector<25x16xf32> -> vector<25x16xf32>
    %91 = arith.addf %89, %90 : vector<25x16xf32>
    %cst_40 = arith.constant dense<0.000000e+00> : vector<25x16xf32>
    %92 = tpu.matmul %84, %56, %cst_40 {dimension_numbers = #tpu.dot_dimension_numbers<[1], [0], [0], [1], [0, 0, 1, 1], [], []>} : vector<25x8xf32>, vector<8x16xf32>, vector<25x16xf32> -> vector<25x16xf32>
    %93 = arith.addf %91, %92 : vector<25x16xf32>
    %cst_41 = arith.constant 0.000000e+00 : f32
    %94 = vector.broadcast %cst_41 : f32 to vector<1x16xf32>
    %cst_42 = arith.constant 0.000000e+00 : f32
    %95 = vector.broadcast %cst_42 : f32 to vector<1x16xf32>
    %cst_43 = arith.constant dense<0.000000e+00> : vector<16xf32>
    %96 = vector.multi_reduction <add>, %75, %cst_43 [0] : vector<25x16xf32> to vector<16xf32>
    %97 = vector.shape_cast %96 : vector<16xf32> to vector<1x16xf32>
    %98 = arith.addf %94, %97 : vector<1x16xf32>
    %99 = arith.mulf %75, %75 : vector<25x16xf32>
    %cst_44 = arith.constant dense<0.000000e+00> : vector<16xf32>
    %100 = vector.multi_reduction <add>, %99, %cst_44 [0] : vector<25x16xf32> to vector<16xf32>
    %101 = vector.shape_cast %100 : vector<16xf32> to vector<1x16xf32>
    %102 = arith.addf %95, %101 : vector<1x16xf32>
    %cst_45 = arith.constant dense<0.000000e+00> : vector<16xf32>
    %103 = vector.multi_reduction <add>, %93, %cst_45 [0] : vector<25x16xf32> to vector<16xf32>
    %104 = vector.shape_cast %103 : vector<16xf32> to vector<1x16xf32>
    %105 = arith.addf %98, %104 : vector<1x16xf32>
    %106 = arith.mulf %93, %93 : vector<25x16xf32>
    %cst_46 = arith.constant dense<0.000000e+00> : vector<16xf32>
    %107 = vector.multi_reduction <add>, %106, %cst_46 [0] : vector<25x16xf32> to vector<16xf32>
    %108 = vector.shape_cast %107 : vector<16xf32> to vector<1x16xf32>
    %109 = arith.addf %102, %108 : vector<1x16xf32>
    %cst_47 = arith.constant 5.000000e+01 : f32
    %110 = vector.broadcast %cst_47 : f32 to vector<1x16xf32>
    %111 = arith.divf %105, %110 : vector<1x16xf32>
    %cst_48 = arith.constant 5.000000e+01 : f32
    %112 = vector.broadcast %cst_48 : f32 to vector<1x16xf32>
    %113 = arith.divf %109, %112 : vector<1x16xf32>
    %114 = arith.mulf %111, %111 : vector<1x16xf32>
    %115 = arith.subf %113, %114 : vector<1x16xf32>
    %cst_49 = arith.constant 9.99999974E-6 : f32
    %116 = vector.broadcast %cst_49 : f32 to vector<1x16xf32>
    %117 = arith.addf %115, %116 : vector<1x16xf32>
    %118 = math.rsqrt %117 : vector<1x16xf32>
    %c0_50 = arith.constant 0 : index
    %c0_51 = arith.constant 0 : index
    %119 = vector.load %arg6[%c0_50, %c0_51] : memref<1x16xf32, #tpu.memory_space<vmem>>, vector<1x16xf32>
    %120 = arith.mulf %118, %119 : vector<1x16xf32>
    %c0_52 = arith.constant 0 : index
    %c0_53 = arith.constant 0 : index
    %121 = vector.load %arg7[%c0_52, %c0_53] : memref<1x16xf32, #tpu.memory_space<vmem>>, vector<1x16xf32>
    %122 = arith.mulf %111, %120 : vector<1x16xf32>
    %123 = arith.subf %121, %122 : vector<1x16xf32>
    %c0_54 = arith.constant 0 : index
    %c0_55 = arith.constant 0 : index
    %c0_56 = arith.constant 0 : index
    %124 = vector.load %arg8[%c0_54, %c0_55, %c0_56] : memref<2x25x16xf32, #tpu.memory_space<vmem>>, vector<1x25x16xf32>
    %125 = vector.shape_cast %124 : vector<1x25x16xf32> to vector<25x16xf32>
    %c1_57 = arith.constant 1 : index
    %c0_58 = arith.constant 0 : index
    %c0_59 = arith.constant 0 : index
    %126 = vector.load %arg8[%c1_57, %c0_58, %c0_59] : memref<2x25x16xf32, #tpu.memory_space<vmem>>, vector<1x25x16xf32>
    %127 = vector.shape_cast %126 : vector<1x25x16xf32> to vector<25x16xf32>
    %128 = vector.broadcast %120 : vector<1x16xf32> to vector<25x16xf32>
    %129 = arith.mulf %75, %128 : vector<25x16xf32>
    %130 = vector.broadcast %123 : vector<1x16xf32> to vector<25x16xf32>
    %131 = arith.addf %129, %130 : vector<25x16xf32>
    %cst_60 = arith.constant 1.000000e+00 : f32
    %132 = vector.broadcast %cst_60 : f32 to vector<25x16xf32>
    %133 = arith.cmpf ogt, %131, %132 : vector<25x16xf32>
    %134 = arith.extui %133 : vector<25x16xi1> to vector<25x16xi32>
    %135 = arith.sitofp %134 : vector<25x16xi32> to vector<25x16xf32>
    %136 = arith.mulf %135, %125 : vector<25x16xf32>
    %137 = vector.shape_cast %136 : vector<25x16xf32> to vector<1x25x16xf32>
    %cst_61 = arith.constant dense<0.000000e+00> : vector<1xf32>
    %138 = vector.multi_reduction <add>, %137, %cst_61 [1, 2] : vector<1x25x16xf32> to vector<1xf32>
    %139 = vector.shape_cast %138 : vector<1xf32> to vector<1x1x1xf32>
    %140 = vector.extract %139[0, 0, 0] : f32 from vector<1x1x1xf32>
    %141 = vector.broadcast %140 : f32 to vector<1x1xf32>
    %142 = arith.mulf %135, %127 : vector<25x16xf32>
    %143 = vector.shape_cast %142 : vector<25x16xf32> to vector<1x25x16xf32>
    %cst_62 = arith.constant dense<0.000000e+00> : vector<1xf32>
    %144 = vector.multi_reduction <add>, %143, %cst_62 [1, 2] : vector<1x25x16xf32> to vector<1xf32>
    %145 = vector.shape_cast %144 : vector<1xf32> to vector<1x1x1xf32>
    %146 = vector.extract %145[0, 0, 0] : f32 from vector<1x1x1xf32>
    %147 = vector.broadcast %146 : f32 to vector<1x1xf32>
    %148 = tpu.concatenate %141, %147 in 1 : vector<1x1xf32>, vector<1x1xf32> -> vector<1x2xf32>
    %149 = vector.broadcast %120 : vector<1x16xf32> to vector<25x16xf32>
    %150 = arith.mulf %93, %149 : vector<25x16xf32>
    %151 = vector.broadcast %123 : vector<1x16xf32> to vector<25x16xf32>
    %152 = arith.addf %150, %151 : vector<25x16xf32>
    %cst_63 = arith.constant 1.000000e+00 : f32
    %153 = vector.broadcast %cst_63 : f32 to vector<25x16xf32>
    %154 = arith.cmpf ogt, %152, %153 : vector<25x16xf32>
    %155 = arith.extui %154 : vector<25x16xi1> to vector<25x16xi32>
    %156 = arith.sitofp %155 : vector<25x16xi32> to vector<25x16xf32>
    %157 = arith.mulf %156, %125 : vector<25x16xf32>
    %158 = vector.shape_cast %157 : vector<25x16xf32> to vector<1x25x16xf32>
    %cst_64 = arith.constant dense<0.000000e+00> : vector<1xf32>
    %159 = vector.multi_reduction <add>, %158, %cst_64 [1, 2] : vector<1x25x16xf32> to vector<1xf32>
    %160 = vector.shape_cast %159 : vector<1xf32> to vector<1x1x1xf32>
    %161 = vector.extract %160[0, 0, 0] : f32 from vector<1x1x1xf32>
    %162 = vector.broadcast %161 : f32 to vector<1x1xf32>
    %163 = arith.mulf %156, %127 : vector<25x16xf32>
    %164 = vector.shape_cast %163 : vector<25x16xf32> to vector<1x25x16xf32>
    %cst_65 = arith.constant dense<0.000000e+00> : vector<1xf32>
    %165 = vector.multi_reduction <add>, %164, %cst_65 [1, 2] : vector<1x25x16xf32> to vector<1xf32>
    %166 = vector.shape_cast %165 : vector<1xf32> to vector<1x1x1xf32>
    %167 = vector.extract %166[0, 0, 0] : f32 from vector<1x1x1xf32>
    %168 = vector.broadcast %167 : f32 to vector<1x1xf32>
    %169 = tpu.concatenate %162, %168 in 1 : vector<1x1xf32>, vector<1x1xf32> -> vector<1x2xf32>
    %170 = tpu.concatenate %148, %169 in 0 : vector<1x2xf32>, vector<1x2xf32> -> vector<2x2xf32>
    %c0_66 = arith.constant 0 : index
    %c0_67 = arith.constant 0 : index
    %171 = vector.load %arg9[%c0_66, %c0_67] : memref<1x2xf32, #tpu.memory_space<vmem>>, vector<1x2xf32>
    %172 = vector.broadcast %171 : vector<1x2xf32> to vector<2x2xf32>
    %173 = arith.addf %170, %172 : vector<2x2xf32>
    %c0_68 = arith.constant 0 : index
    %c0_69 = arith.constant 0 : index
    %174 = vector.load %arg11[%c0_68, %c0_69] : memref<2x2xf32, #tpu.memory_space<vmem>>, vector<2x2xf32>
    tpu.vector_store %arg11[%c0_68, %c0_69], %173 {strides = array<i32>} : memref<2x2xf32, #tpu.memory_space<vmem>>, vector<2x2xf32>,
    %cst_70 = arith.constant 1.000000e+00 : f32
    %175 = vector.broadcast %cst_70 : f32 to vector<2x2xf32>
    %176 = arith.cmpf ogt, %173, %175 : vector<2x2xf32>
    %177 = arith.extui %176 : vector<2x2xi1> to vector<2x2xi32>
    %178 = arith.sitofp %177 : vector<2x2xi32> to vector<2x2xf32>
    %c0_71 = arith.constant 0 : index
    %c0_72 = arith.constant 0 : index
    %179 = vector.load %arg10[%c0_71, %c0_72] : memref<2x2xf32, #tpu.memory_space<vmem>>, vector<2x2xf32>
    tpu.vector_store %arg10[%c0_71, %c0_72], %178 {strides = array<i32>} : memref<2x2xf32, #tpu.memory_space<vmem>>, vector<2x2xf32>,
    return
  }
}

</mosaic_0001>

<llo_original>
// kernel: spiking_densenet_forward.1
$region0: #{spiking_densenet_forward.1}
  #allocation0 [shape = 'u32[]', space=smem, size = 0x4, offset = 0x4, fixed_abs, tag = 'smem constant byte address 0x4 - core index']
  #allocation1 [shape = 'u32[72,128]{1,0:T(1,128)}', space=vmem, size = 0x9000, scoped, tag = 'internal scratch']
  %s0 = inlined_call_operand.vmem [shape: f32[50,7], index: 0, kind: input, shape index: {}]
  %s1 = inlined_call_operand.vmem [shape: f32[50,7], index: 1, kind: input, shape index: {}]
  %s2 = inlined_call_operand.vmem [shape: f32[7,8], index: 2, kind: input, shape index: {}]
  %s3 = inlined_call_operand.vmem [shape: f32[1,8], index: 3, kind: input, shape index: {}]
  %s4 = inlined_call_operand.vmem [shape: f32[1,8], index: 4, kind: input, shape index: {}]
  %s5 = inlined_call_operand.vmem [shape: f32[5,8,16], index: 5, kind: input, shape index: {}]
  %s6 = inlined_call_operand.vmem [shape: f32[1,16], index: 6, kind: input, shape index: {}]
  %s7 = inlined_call_operand.vmem [shape: f32[1,16], index: 7, kind: input, shape index: {}]
  %s8 = inlined_call_operand.vmem [shape: f32[2,25,16], index: 8, kind: input, shape index: {}]
  %s9 = inlined_call_operand.vmem [shape: f32[1,2], index: 9, kind: input, shape index: {}]
  %s10 = inlined_call_operand.hbm [shape: f32[2,2], index: 10, kind: output, shape index: {0}]
  %s11 = inlined_call_operand.hbm [shape: f32[2,2], index: 11, kind: output, shape index: {1}]
  %12 = xla_tuple %s10, %s11
  %s13 = sld [smem:[#allocation0]]
  $region58: #{spiking_densenet_forward.1} parent=0
    _
  %s15 = ssub.s32 1, %s13
  %s16 = scalar_select 0, %s15, %s13
  $region1: #{spiking_densenet_forward.1} parent=0
    #allocation2 [shape = 'u8[1024]{0}', space=vmem, size = 0x400, scoped, tag = 'output window, operand 0, single buffered']
    #allocation3 [shape = 's32[1]{0}', space=sflag, size = 0x4, scoped, tag = 'scoped memory for spiking_densenet_forward.1']
    #allocation4 [shape = 'u8[1024]{0}', space=vmem, size = 0x400, scoped, tag = 'output window, operand 1, single buffered']
    #allocation5 [shape = 's32[1]{0}', space=sflag, size = 0x4, scoped, tag = 'scoped memory for spiking_densenet_forward.1']
    %17 = vsyncpa [#allocation3], 0
    %18 = vsyncpa [#allocation5], 0
    // Predicated region
    $region2: #{spiking_densenet_forward.1} parent=1 // pred_check
      _
    $region3: #{spiking_densenet_forward.1} parent=1 // pred_check_branch
      %20 = sbr.rel (0) target = $region5
    $region4: #{spiking_densenet_forward.1} parent=1 // pred_region
      _
    $region5: #{spiking_densenet_forward.1} parent=1 // pred_fallthru
      _
    // Predicated region
    $region6: #{spiking_densenet_forward.1} parent=1 // pred_check
      _
    $region7: #{spiking_densenet_forward.1} parent=1 // pred_check_branch
      %22 = sbr.rel (0) target = $region9
    $region8: #{spiking_densenet_forward.1} parent=1 // pred_region
      _
    $region9: #{spiking_densenet_forward.1} parent=1 // pred_fallthru
      _
    // Predicated region
    $region10: #{spiking_densenet_forward.1} parent=1 // pred_check
      _
    $region11: #{spiking_densenet_forward.1} parent=1 // pred_check_branch
      %24 = sbr.rel (0) target = $region13
    $region12: #{spiking_densenet_forward.1} parent=1 // pred_region
      _
    $region13: #{spiking_densenet_forward.1} parent=1 // pred_fallthru
      _
    // Predicated region
    $region14: #{spiking_densenet_forward.1} parent=1 // pred_check
      _
    $region15: #{spiking_densenet_forward.1} parent=1 // pred_check_branch
      %26 = sbr.rel (0) target = $region17
    $region16: #{spiking_densenet_forward.1} parent=1 // pred_region
      _
    $region17: #{spiking_densenet_forward.1} parent=1 // pred_fallthru
      _
    // Predicated region
    $region18: #{spiking_densenet_forward.1} parent=1 // pred_check
      _
    $region19: #{spiking_densenet_forward.1} parent=1 // pred_check_branch
      %28 = sbr.rel (0) target = $region21
    $region20: #{spiking_densenet_forward.1} parent=1 // pred_region
      _
    $region21: #{spiking_densenet_forward.1} parent=1 // pred_fallthru
      _
    // Predicated region
    $region22: #{spiking_densenet_forward.1} parent=1 // pred_check
      _
    $region23: #{spiking_densenet_forward.1} parent=1 // pred_check_branch
      %30 = sbr.rel (0) target = $region25
    $region24: #{spiking_densenet_forward.1} parent=1 // pred_region
      _
    $region25: #{spiking_densenet_forward.1} parent=1 // pred_fallthru
      _
    // Predicated region
    $region26: #{spiking_densenet_forward.1} parent=1 // pred_check
      _
    $region27: #{spiking_densenet_forward.1} parent=1 // pred_check_branch
      %32 = sbr.rel (0) target = $region29
    $region28: #{spiking_densenet_forward.1} parent=1 // pred_region
      _
    $region29: #{spiking_densenet_forward.1} parent=1 // pred_fallthru
      _
    // Predicated region
    $region30: #{spiking_densenet_forward.1} parent=1 // pred_check
      _
    $region31: #{spiking_densenet_forward.1} parent=1 // pred_check_branch
      %34 = sbr.rel (0) target = $region33
    $region32: #{spiking_densenet_forward.1} parent=1 // pred_region
      _
    $region33: #{spiking_densenet_forward.1} parent=1 // pred_fallthru
      _
    // Predicated region
    $region34: #{spiking_densenet_forward.1} parent=1 // pred_check
      _
    $region35: #{spiking_densenet_forward.1} parent=1 // pred_check_branch
      %36 = sbr.rel (0) target = $region37
    $region36: #{spiking_densenet_forward.1} parent=1 // pred_region
      _
    $region37: #{spiking_densenet_forward.1} parent=1 // pred_fallthru
      _
    // Predicated region
    $region38: #{spiking_densenet_forward.1} parent=1 // pred_check
      _
    $region39: #{spiking_densenet_forward.1} parent=1 // pred_check_branch
      %38 = sbr.rel (0) target = $region41
    $region40: #{spiking_densenet_forward.1} parent=1 // pred_region
      _
    $region41: #{spiking_densenet_forward.1} parent=1 // pred_fallthru
      _
    %v39 = vld [vmem:[%s2] sm:$0x7f]
    %v40 = vld [vmem:[%s0] sm:$0xff]
    %v41 = vld [vmem:[%s0 + $0x8] sm:$0xff]
    %v42 = vld [vmem:[%s0 + $0x10] sm:$0xff]
    %v43 = vld [vmem:[%s0 + $0x18] sm:$0xff]
    %v44 = vld [vmem:[%s0 + $0x20] sm:$0xff]
    %v45 = vld [vmem:[%s0 + $0x28] sm:$0xff]
    %v46 = vld [vmem:[%s0 + $0x30] sm:$0x3]
    %vm47 = vcmask 56320
    %v49 = vsel %vm47, %v40, 0
    %v52 = vsel %vm47, %v41, 0
    %v55 = vsel %vm47, %v42, 0
    %v58 = vsel %vm47, %v43, 0
    %v61 = vsel %vm47, %v44, 0
    %v64 = vsel %vm47, %v45, 0
    %v67 = vsel %vm47, %v46, 0
    %vm69 = vcmask 1046528
    %v71 = vsel %vm69, %v39, 0
    %73 = vmatpush.msra.mxu0 0.0
    %74 = vmatpush.msra.mxu0 0.0
    %75 = vmatpush.msra.mxu0 0.0
    %76 = vmatpush.msra.mxu0 0.0
    %77 = vmatpush.msra.mxu0 0.0
    %78 = vmatpush.msra.mxu0 0.0
    %79 = vmatpush.msra.mxu0 0.0
    %80 = vmatpush.msra.mxu0 0.0
    %81 = vmatpush.msra.mxu0 0.0
    %82 = vmatpush.msra.mxu0 0.0
    %83 = vmatpush.msra.mxu0 0.0
    %84 = vmatpush.msra.mxu0 0.0
    %85 = vmatpush.msra.mxu0 0.0
    %86 = vmatpush.msra.mxu0 0.0
    %87 = vmatpush.msra.mxu0 0.0
    %88 = vmatpush.msra.mxu0 %v71
    %89 = vmatmul.f32.gmra.mxu0 %v49
    %v90 = vpop.f32.mrf.mxu0
    %v91 = vadd.f32 0.0, %v90
    %92 = vmatmul.f32.gmra.mxu0 %v52
    %v93 = vpop.f32.mrf.mxu0
    %v94 = vadd.f32 0.0, %v93
    %95 = vmatmul.f32.gmra.mxu0 %v55
    %v96 = vpop.f32.mrf.mxu0
    %v97 = vadd.f32 0.0, %v96
    %98 = vmatmul.f32.gmra.mxu0 %v58
    %v99 = vpop.f32.mrf.mxu0
    %v100 = vadd.f32 0.0, %v99
    %101 = vmatmul.f32.gmra.mxu0 %v61
    %v102 = vpop.f32.mrf.mxu0
    %v103 = vadd.f32 0.0, %v102
    %104 = vmatmul.f32.gmra.mxu0 %v64
    %v105 = vpop.f32.mrf.mxu0
    %v106 = vadd.f32 0.0, %v105
    %107 = vmatmul.f32.gmra.mxu0 %v67
    %v108 = vpop.f32.mrf.mxu0
    %v109 = vadd.f32 0.0, %v108
    %110 = vdwg.mxu0
    %v111 = vld [vmem:[%s1] sm:$0xff]
    %v112 = vld [vmem:[%s1 + $0x8] sm:$0xff]
    %v113 = vld [vmem:[%s1 + $0x10] sm:$0xff]
    %v114 = vld [vmem:[%s1 + $0x18] sm:$0xff]
    %v115 = vld [vmem:[%s1 + $0x20] sm:$0xff]
    %v116 = vld [vmem:[%s1 + $0x28] sm:$0xff]
    %v117 = vld [vmem:[%s1 + $0x30] sm:$0x3]
    %v119 = vsel %vm47, %v111, 0
    %v122 = vsel %vm47, %v112, 0
    %v125 = vsel %vm47, %v113, 0
    %v128 = vsel %vm47, %v114, 0
    %v131 = vsel %vm47, %v115, 0
    %v134 = vsel %vm47, %v116, 0
    %v137 = vsel %vm47, %v117, 0
    %139 = vmatpush.msra.mxu0 0.0
    %140 = vmatpush.msra.mxu0 0.0
    %141 = vmatpush.msra.mxu0 0.0
    %142 = vmatpush.msra.mxu0 0.0
    %143 = vmatpush.msra.mxu0 0.0
    %144 = vmatpush.msra.mxu0 0.0
    %145 = vmatpush.msra.mxu0 0.0
    %146 = vmatpush.msra.mxu0 0.0
    %147 = vmatpush.msra.mxu0 0.0
    %148 = vmatpush.msra.mxu0 0.0
    %149 = vmatpush.msra.mxu0 0.0
    %150 = vmatpush.msra.mxu0 0.0
    %151 = vmatpush.msra.mxu0 0.0
    %152 = vmatpush.msra.mxu0 0.0
    %153 = vmatpush.msra.mxu0 0.0
    %154 = vmatpush.msra.mxu0 %v71
    %155 = vmatmul.f32.gmra.mxu0 %v119
    %v156 = vpop.f32.mrf.mxu0
    %v157 = vadd.f32 0.0, %v156
    %158 = vmatmul.f32.gmra.mxu0 %v122
    %v159 = vpop.f32.mrf.mxu0
    %v160 = vadd.f32 0.0, %v159
    %161 = vmatmul.f32.gmra.mxu0 %v125
    %v162 = vpop.f32.mrf.mxu0
    %v163 = vadd.f32 0.0, %v162
    %164 = vmatmul.f32.gmra.mxu0 %v128
    %v165 = vpop.f32.mrf.mxu0
    %v166 = vadd.f32 0.0, %v165
    %167 = vmatmul.f32.gmra.mxu0 %v131
    %v168 = vpop.f32.mrf.mxu0
    %v169 = vadd.f32 0.0, %v168
    %170 = vmatmul.f32.gmra.mxu0 %v134
    %v171 = vpop.f32.mrf.mxu0
    %v172 = vadd.f32 0.0, %v171
    %173 = vmatmul.f32.gmra.mxu0 %v137
    %v174 = vpop.f32.mrf.mxu0
    %v175 = vadd.f32 0.0, %v174
    %176 = vdwg.mxu0
    %vm177 = vcmask 64512
    %v178 = vsel %vm177, %v91, 0.0
    %v179 = vsel %vm177, %v94, 0.0
    %v180 = vadd.f32 %v178, %v179
    %v181 = vsel %vm177, %v97, 0.0
    %v182 = vadd.f32 %v180, %v181
    %v183 = vsel %vm177, %v100, 0.0
    %v184 = vadd.f32 %v182, %v183
    %v185 = vsel %vm177, %v103, 0.0
    %v186 = vadd.f32 %v184, %v185
    %v187 = vsel %vm177, %v106, 0.0
    %v188 = vadd.f32 %v186, %v187
    %vm189 = vcmask 58368
    %v190 = vsel %vm189, %v109, 0.0
    %v191 = vadd.f32 %v188, %v190
    %v192 = vrot.slane %v191, 4
    %v193 = vadd.f32 %v191, %v192
    %v194 = vrot.slane %v193, 2
    %v195 = vadd.f32 %v193, %v194
    %v196 = vrot.slane %v195, 1
    %v197 = vadd.f32 %v195, %v196
    %v198 = vsel %vm177, %v157, 0.0
    %v199 = vsel %vm177, %v160, 0.0
    %v200 = vadd.f32 %v198, %v199
    %v201 = vsel %vm177, %v163, 0.0
    %v202 = vadd.f32 %v200, %v201
    %v203 = vsel %vm177, %v166, 0.0
    %v204 = vadd.f32 %v202, %v203
    %v205 = vsel %vm177, %v169, 0.0
    %v206 = vadd.f32 %v204, %v205
    %v207 = vsel %vm177, %v172, 0.0
    %v208 = vadd.f32 %v206, %v207
    %v209 = vsel %vm189, %v175, 0.0
    %v210 = vadd.f32 %v208, %v209
    %v211 = vrot.slane %v210, 4
    %v212 = vadd.f32 %v210, %v211
    %v213 = vrot.slane %v212, 2
    %v214 = vadd.f32 %v212, %v213
    %v215 = vrot.slane %v214, 1
    %v216 = vadd.f32 %v214, %v215
    %v217 = vadd.f32 %v197, %v216
    %v218 = vmul.f32 %v91, %v91
    %v219 = vmul.f32 %v94, %v94
    %v220 = vmul.f32 %v97, %v97
    %v221 = vmul.f32 %v100, %v100
    %v222 = vmul.f32 %v103, %v103
    %v223 = vmul.f32 %v106, %v106
    %v224 = vmul.f32 %v109, %v109
    %v225 = vsel %vm177, %v218, 0.0
    %v226 = vsel %vm177, %v219, 0.0
    %v227 = vadd.f32 %v225, %v226
    %v228 = vsel %vm177, %v220, 0.0
    %v229 = vadd.f32 %v227, %v228
    %v230 = vsel %vm177, %v221, 0.0
    %v231 = vadd.f32 %v229, %v230
    %v232 = vsel %vm177, %v222, 0.0
    %v233 = vadd.f32 %v231, %v232
    %v234 = vsel %vm177, %v223, 0.0
    %v235 = vadd.f32 %v233, %v234
    %v236 = vsel %vm189, %v224, 0.0
    %v237 = vadd.f32 %v235, %v236
    %v238 = vrot.slane %v237, 4
    %v239 = vadd.f32 %v237, %v238
    %v240 = vrot.slane %v239, 2
    %v241 = vadd.f32 %v239, %v240
    %v242 = vrot.slane %v241, 1
    %v243 = vadd.f32 %v241, %v242
    %v244 = vmul.f32 %v157, %v157
    %v245 = vmul.f32 %v160, %v160
    %v246 = vmul.f32 %v163, %v163
    %v247 = vmul.f32 %v166, %v166
    %v248 = vmul.f32 %v169, %v169
    %v249 = vmul.f32 %v172, %v172
    %v250 = vmul.f32 %v175, %v175
    %v251 = vsel %vm177, %v244, 0.0
    %v252 = vsel %vm177, %v245, 0.0
    %v253 = vadd.f32 %v251, %v252
    %v254 = vsel %vm177, %v246, 0.0
    %v255 = vadd.f32 %v253, %v254
    %v256 = vsel %vm177, %v247, 0.0
    %v257 = vadd.f32 %v255, %v256
    %v258 = vsel %vm177, %v248, 0.0
    %v259 = vadd.f32 %v257, %v258
    %v260 = vsel %vm177, %v249, 0.0
    %v261 = vadd.f32 %v259, %v260
    %v262 = vsel %vm189, %v250, 0.0
    %v263 = vadd.f32 %v261, %v262
    %v264 = vrot.slane %v263, 4
    %v265 = vadd.f32 %v263, %v264
    %v266 = vrot.slane %v265, 2
    %v267 = vadd.f32 %v265, %v266
    %v268 = vrot.slane %v267, 1
    %v269 = vadd.f32 %v267, %v268
    %v270 = vadd.f32 %v243, %v269
    %v271 = vrcp.pop 100.0
    %v272 = vmul.f32 100.0, %v271
    %v273 = vsub.f32 1.0, %v272
    %v274 = vmul.f32 %v271, %v273
    %v275 = vadd.f32 %v271, %v274
    %vm276 = vweird.f32 %v271
    %v277 = vsel %vm276, %v271, %v275
    %v278 = vmul.f32 %v217, %v277
    %v279 = vmul.f32 %v270, %v277
    %v280 = vmul.f32 %v278, %v278
    %v281 = vsub.f32 %v279, %v280
    %v282 = vadd.f32 %v281, 1e-05
    %v283 = vrsqrt.pop %v282
    %v284 = vmul.f32 %v283, %v282
    %v285 = vmul.f32 %v284, %v283
    %v286 = vmul.f32 0.5, %v285
    %v287 = vsub.f32 1.5, %v286
    %v288 = vmul.f32 %v283, %v287
    %vm289 = vweird.f32 %v282
    %vm290 = vweird.f32 %v283
    %vm291 = vmor %vm289, %vm290
    %v292 = vsel %vm291, %v283, %v288
    %v293 = vld [vmem:[%s3] sm:$0x1]
    %v294 = vmul.f32 %v292, %v293
    %v295 = vld [vmem:[%s4] sm:$0x1]
    %v296 = vmul.f32 %v278, %v294
    %v297 = vsub.f32 %v295, %v296
    %v298 = vperm.slane %v294, 0
    %v299 = vmul.f32 %v91, %v298
    %v300 = vmul.f32 %v94, %v298
    %v301 = vmul.f32 %v97, %v298
    %v302 = vmul.f32 %v100, %v298
    %v303 = vmul.f32 %v103, %v298
    %v304 = vmul.f32 %v106, %v298
    %v305 = vmul.f32 %v109, %v298
    %v307 = vperm.slane %v297, 0
    %v309 = vadd.f32 %v299, %v307
    %v310 = vadd.f32 %v300, %v307
    %v311 = vadd.f32 %v301, %v307
    %v312 = vadd.f32 %v302, %v307
    %v313 = vadd.f32 %v303, %v307
    %v314 = vadd.f32 %v304, %v307
    %v315 = vadd.f32 %v305, %v307
    %vm316 = vcmp.gt.f32.partialorder %v309, 1.0
    %vm317 = vcmp.gt.f32.partialorder %v310, 1.0
    %vm318 = vcmp.gt.f32.partialorder %v311, 1.0
    %vm319 = vcmp.gt.f32.partialorder %v312, 1.0
    %vm320 = vcmp.gt.f32.partialorder %v313, 1.0
    %vm321 = vcmp.gt.f32.partialorder %v314, 1.0
    %vm322 = vcmp.gt.f32.partialorder %v315, 1.0
    %v323 = vsel %vm316, 1, 0
    %v324 = vsel %vm317, 1, 0
    %v325 = vsel %vm318, 1, 0
    %v326 = vsel %vm319, 1, 0
    %v327 = vsel %vm320, 1, 0
    %v328 = vsel %vm321, 1, 0
    %v329 = vsel %vm322, 1, 0
    %v330 = vcvt.s32.f32 %v323
    %v331 = vcvt.s32.f32 %v324
    %v332 = vcvt.s32.f32 %v325
    %v333 = vcvt.s32.f32 %v326
    %v334 = vcvt.s32.f32 %v327
    %v335 = vcvt.s32.f32 %v328
    %v336 = vcvt.s32.f32 %v329
    %v337 = vmul.f32 %v157, %v298
    %v338 = vmul.f32 %v160, %v298
    %v339 = vmul.f32 %v163, %v298
    %v340 = vmul.f32 %v166, %v298
    %v341 = vmul.f32 %v169, %v298
    %v342 = vmul.f32 %v172, %v298
    %v343 = vmul.f32 %v175, %v298
    %v344 = vadd.f32 %v337, %v307
    %v345 = vadd.f32 %v338, %v307
    %v346 = vadd.f32 %v339, %v307
    %v347 = vadd.f32 %v340, %v307
    %v348 = vadd.f32 %v341, %v307
    %v349 = vadd.f32 %v342, %v307
    %v350 = vadd.f32 %v343, %v307
    %vm351 = vcmp.gt.f32.partialorder %v344, 1.0
    %vm352 = vcmp.gt.f32.partialorder %v345, 1.0
    %vm353 = vcmp.gt.f32.partialorder %v346, 1.0
    %vm354 = vcmp.gt.f32.partialorder %v347, 1.0
    %vm355 = vcmp.gt.f32.partialorder %v348, 1.0
    %vm356 = vcmp.gt.f32.partialorder %v349, 1.0
    %vm357 = vcmp.gt.f32.partialorder %v350, 1.0
    %v358 = vsel %vm351, 1, 0
    %v359 = vsel %vm352, 1, 0
    %v360 = vsel %vm353, 1, 0
    %v361 = vsel %vm354, 1, 0
    %v362 = vsel %vm355, 1, 0
    %v363 = vsel %vm356, 1, 0
    %v364 = vsel %vm357, 1, 0
    %v365 = vcvt.s32.f32 %v358
    %v366 = vcvt.s32.f32 %v359
    %v367 = vcvt.s32.f32 %v360
    %v368 = vcvt.s32.f32 %v361
    %v369 = vcvt.s32.f32 %v362
    %v370 = vcvt.s32.f32 %v363
    %v371 = vcvt.s32.f32 %v364
    %v372 = vld [vmem:[%s5] sm:$0xff]
    %s373 = scalar_lea.vmem %s5, 8
    %v374 = vld [vmem:[%s373] sm:$0xff]
    %s375 = scalar_lea.vmem %s5, 16
    %v376 = vld [vmem:[%s375] sm:$0xff]
    %s377 = scalar_lea.vmem %s5, 24
    %v378 = vld [vmem:[%s377] sm:$0xff]
    %s379 = scalar_lea.vmem %s5, 32
    %v380 = vld [vmem:[%s379] sm:$0xff]
    %vm385 = vcmask 1040384
    %v386 = vrot.slane %v330, 7
    %v387 = vrot.slane %v331, 7
    %v388 = vsel %vm385, %v386, %v387
    %v389 = vrot.slane %v332, 7
    %v390 = vsel %vm385, %v387, %v389
    %v391 = vrot.slane %v333, 7
    %v392 = vsel %vm385, %v389, %v391
    %v395 = vsel %vm385, 0.0, %v386
    %vm396 = vcmask 1041408
    %v397 = vsel %vm396, %v392, 0.0
    %v402 = vrot.slane %v365, 7
    %v403 = vrot.slane %v366, 7
    %v404 = vsel %vm385, %v402, %v403
    %v405 = vrot.slane %v367, 7
    %v406 = vsel %vm385, %v403, %v405
    %v407 = vrot.slane %v368, 7
    %v408 = vsel %vm385, %v405, %v407
    %v411 = vsel %vm385, 0.0, %v402
    %v412 = vsel %vm396, %v408, 0.0
    %v414 = vsel %vm177, %v411, 0
    %v416 = vsel %vm177, %v404, 0
    %v418 = vsel %vm177, %v406, 0
    %v421 = vsel %vm177, %v412, 0
    %423 = vmatpush.msra.mxu0 0.0
    %424 = vmatpush.msra.mxu0 0.0
    %425 = vmatpush.msra.mxu0 0.0
    %426 = vmatpush.msra.mxu0 0.0
    %427 = vmatpush.msra.mxu0 0.0
    %428 = vmatpush.msra.mxu0 0.0
    %429 = vmatpush.msra.mxu0 0.0
    %430 = vmatpush.msra.mxu0 0.0
    %431 = vmatpush.msra.mxu0 0.0
    %432 = vmatpush.msra.mxu0 0.0
    %433 = vmatpush.msra.mxu0 0.0
    %434 = vmatpush.msra.mxu0 0.0
    %435 = vmatpush.msra.mxu0 0.0
    %436 = vmatpush.msra.mxu0 0.0
    %437 = vmatpush.msra.mxu0 0.0
    %438 = vmatpush.msra.mxu0 %v374
    %439 = vmatmul.f32.gmra.mxu0 %v414
    %v440 = vpop.f32.mrf.mxu0
    %v441 = vadd.f32 0.0, %v440
    %442 = vmatmul.f32.gmra.mxu0 %v416
    %v443 = vpop.f32.mrf.mxu0
    %v444 = vadd.f32 0.0, %v443
    %445 = vmatmul.f32.gmra.mxu0 %v418
    %v446 = vpop.f32.mrf.mxu0
    %v447 = vadd.f32 0.0, %v446
    %448 = vmatmul.f32.gmra.mxu0 %v421
    %v449 = vpop.f32.mrf.mxu0
    %v450 = vadd.f32 0.0, %v449
    %451 = vdwg.mxu0
    %v453 = vsel %vm177, %v395, 0
    %v455 = vsel %vm177, %v388, 0
    %v457 = vsel %vm177, %v390, 0
    %v460 = vsel %vm177, %v397, 0
    %462 = vmatpush.msra.mxu0 0.0
    %463 = vmatpush.msra.mxu0 0.0
    %464 = vmatpush.msra.mxu0 0.0
    %465 = vmatpush.msra.mxu0 0.0
    %466 = vmatpush.msra.mxu0 0.0
    %467 = vmatpush.msra.mxu0 0.0
    %468 = vmatpush.msra.mxu0 0.0
    %469 = vmatpush.msra.mxu0 0.0
    %470 = vmatpush.msra.mxu0 0.0
    %471 = vmatpush.msra.mxu0 0.0
    %472 = vmatpush.msra.mxu0 0.0
    %473 = vmatpush.msra.mxu0 0.0
    %474 = vmatpush.msra.mxu0 0.0
    %475 = vmatpush.msra.mxu0 0.0
    %476 = vmatpush.msra.mxu0 0.0
    %477 = vmatpush.msra.mxu0 %v372
    %478 = vmatmul.f32.gmra.mxu0 %v453
    %v479 = vpop.f32.mrf.mxu0
    %v480 = vadd.f32 %v441, %v479
    %481 = vmatmul.f32.gmra.mxu0 %v455
    %v482 = vpop.f32.mrf.mxu0
    %v483 = vadd.f32 %v444, %v482
    %484 = vmatmul.f32.gmra.mxu0 %v457
    %v485 = vpop.f32.mrf.mxu0
    %v486 = vadd.f32 %v447, %v485
    %487 = vmatmul.f32.gmra.mxu0 %v460
    %v488 = vpop.f32.mrf.mxu0
    %v489 = vadd.f32 %v450, %v488
    %490 = vdwg.mxu0
    %v491 = vrot.slane %v395, 1
    %v492 = vrot.slane %v388, 1
    %v493 = vsel %vm69, %v491, %v492
    %v494 = vrot.slane %v390, 1
    %v495 = vsel %vm69, %v492, %v494
    %v496 = vrot.slane %v397, 1
    %v497 = vsel %vm69, %v494, %v496
    %v498 = vsel %vm177, %v493, 0
    %v500 = vsel %vm177, %v495, 0
    %v502 = vsel %vm177, %v497, 0
    %v504 = vsel %vm177, %v496, 0
    %506 = vmatpush.msra.mxu0 0.0
    %507 = vmatpush.msra.mxu0 0.0
    %508 = vmatpush.msra.mxu0 0.0
    %509 = vmatpush.msra.mxu0 0.0
    %510 = vmatpush.msra.mxu0 0.0
    %511 = vmatpush.msra.mxu0 0.0
    %512 = vmatpush.msra.mxu0 0.0
    %513 = vmatpush.msra.mxu0 0.0
    %514 = vmatpush.msra.mxu0 0.0
    %515 = vmatpush.msra.mxu0 0.0
    %516 = vmatpush.msra.mxu0 0.0
    %517 = vmatpush.msra.mxu0 0.0
    %518 = vmatpush.msra.mxu0 0.0
    %519 = vmatpush.msra.mxu0 0.0
    %520 = vmatpush.msra.mxu0 0.0
    %521 = vmatpush.msra.mxu0 %v376
    %522 = vmatmul.f32.gmra.mxu0 %v498
    %v523 = vpop.f32.mrf.mxu0
    %v524 = vadd.f32 0.0, %v523
    %525 = vmatmul.f32.gmra.mxu0 %v500
    %v526 = vpop.f32.mrf.mxu0
    %v527 = vadd.f32 0.0, %v526
    %528 = vmatmul.f32.gmra.mxu0 %v502
    %v529 = vpop.f32.mrf.mxu0
    %v530 = vadd.f32 0.0, %v529
    %531 = vmatmul.f32.gmra.mxu0 %v504
    %v532 = vpop.f32.mrf.mxu0
    %v533 = vadd.f32 0.0, %v532
    %534 = vdwg.mxu0
    %v535 = vadd.f32 %v480, %v524
    %v536 = vadd.f32 %v483, %v527
    %v537 = vadd.f32 %v486, %v530
    %v538 = vadd.f32 %v489, %v533
    %v539 = vrot.slane %v411, 1
    %v540 = vrot.slane %v404, 1
    %v541 = vsel %vm69, %v539, %v540
    %v542 = vrot.slane %v406, 1
    %v543 = vsel %vm69, %v540, %v542
    %v544 = vrot.slane %v412, 1
    %v545 = vsel %vm69, %v542, %v544
    %v546 = vsel %vm177, %v541, 0
    %v548 = vsel %vm177, %v543, 0
    %v550 = vsel %vm177, %v545, 0
    %v552 = vsel %vm177, %v544, 0
    %554 = vmatpush.msra.mxu0 0.0
    %555 = vmatpush.msra.mxu0 0.0
    %556 = vmatpush.msra.mxu0 0.0
    %557 = vmatpush.msra.mxu0 0.0
    %558 = vmatpush.msra.mxu0 0.0
    %559 = vmatpush.msra.mxu0 0.0
    %560 = vmatpush.msra.mxu0 0.0
    %561 = vmatpush.msra.mxu0 0.0
    %562 = vmatpush.msra.mxu0 0.0
    %563 = vmatpush.msra.mxu0 0.0
    %564 = vmatpush.msra.mxu0 0.0
    %565 = vmatpush.msra.mxu0 0.0
    %566 = vmatpush.msra.mxu0 0.0
    %567 = vmatpush.msra.mxu0 0.0
    %568 = vmatpush.msra.mxu0 0.0
    %569 = vmatpush.msra.mxu0 %v378
    %570 = vmatmul.f32.gmra.mxu0 %v546
    %v571 = vpop.f32.mrf.mxu0
    %v572 = vadd.f32 0.0, %v571
    %573 = vmatmul.f32.gmra.mxu0 %v548
    %v574 = vpop.f32.mrf.mxu0
    %v575 = vadd.f32 0.0, %v574
    %576 = vmatmul.f32.gmra.mxu0 %v550
    %v577 = vpop.f32.mrf.mxu0
    %v578 = vadd.f32 0.0, %v577
    %579 = vmatmul.f32.gmra.mxu0 %v552
    %v580 = vpop.f32.mrf.mxu0
    %v581 = vadd.f32 0.0, %v580
    %582 = vdwg.mxu0
    %v583 = vadd.f32 %v535, %v572
    %v584 = vadd.f32 %v536, %v575
    %v585 = vadd.f32 %v537, %v578
    %v586 = vadd.f32 %v538, %v581
    %vm587 = vcmask 1045504
    %v588 = vrot.slane %v395, 2
    %v589 = vrot.slane %v388, 2
    %v590 = vsel %vm587, %v588, %v589
    %v591 = vrot.slane %v390, 2
    %v592 = vsel %vm587, %v589, %v591
    %v593 = vrot.slane %v397, 2
    %v594 = vsel %vm587, %v591, %v593
    %v595 = vsel %vm177, %v590, 0
    %v597 = vsel %vm177, %v592, 0
    %v599 = vsel %vm177, %v594, 0
    %v601 = vsel %vm177, %v593, 0
    %603 = vmatpush.msra.mxu0 0.0
    %604 = vmatpush.msra.mxu0 0.0
    %605 = vmatpush.msra.mxu0 0.0
    %606 = vmatpush.msra.mxu0 0.0
    %607 = vmatpush.msra.mxu0 0.0
    %608 = vmatpush.msra.mxu0 0.0
    %609 = vmatpush.msra.mxu0 0.0
    %610 = vmatpush.msra.mxu0 0.0
    %611 = vmatpush.msra.mxu0 0.0
    %612 = vmatpush.msra.mxu0 0.0
    %613 = vmatpush.msra.mxu0 0.0
    %614 = vmatpush.msra.mxu0 0.0
    %615 = vmatpush.msra.mxu0 0.0
    %616 = vmatpush.msra.mxu0 0.0
    %617 = vmatpush.msra.mxu0 0.0
    %618 = vmatpush.msra.mxu0 %v380
    %619 = vmatmul.f32.gmra.mxu0 %v595
    %v620 = vpop.f32.mrf.mxu0
    %v621 = vadd.f32 0.0, %v620
    %622 = vmatmul.f32.gmra.mxu0 %v597
    %v623 = vpop.f32.mrf.mxu0
    %v624 = vadd.f32 0.0, %v623
    %625 = vmatmul.f32.gmra.mxu0 %v599
    %v626 = vpop.f32.mrf.mxu0
    %v627 = vadd.f32 0.0, %v626
    %628 = vmatmul.f32.gmra.mxu0 %v601
    %v629 = vpop.f32.mrf.mxu0
    %v630 = vadd.f32 0.0, %v629
    %631 = vdwg.mxu0
    %v632 = vadd.f32 %v583, %v621
    %v633 = vadd.f32 %v584, %v624
    %v634 = vadd.f32 %v585, %v627
    %v635 = vadd.f32 %v586, %v630
    %v636 = vsel %vm385, 0.0, %v333
    %v637 = vsel %vm396, %v336, 0.0
    %v638 = vsel %vm385, 0.0, %v368
    %v639 = vsel %vm396, %v371, 0.0
    %v641 = vsel %vm177, %v638, 0
    %v644 = vsel %vm177, %v369, 0
    %v647 = vsel %vm177, %v370, 0
    %v650 = vsel %vm177, %v639, 0
    %652 = vmatpush.msra.mxu0 0.0
    %653 = vmatpush.msra.mxu0 0.0
    %654 = vmatpush.msra.mxu0 0.0
    %655 = vmatpush.msra.mxu0 0.0
    %656 = vmatpush.msra.mxu0 0.0
    %657 = vmatpush.msra.mxu0 0.0
    %658 = vmatpush.msra.mxu0 0.0
    %659 = vmatpush.msra.mxu0 0.0
    %660 = vmatpush.msra.mxu0 0.0
    %661 = vmatpush.msra.mxu0 0.0
    %662 = vmatpush.msra.mxu0 0.0
    %663 = vmatpush.msra.mxu0 0.0
    %664 = vmatpush.msra.mxu0 0.0
    %665 = vmatpush.msra.mxu0 0.0
    %666 = vmatpush.msra.mxu0 0.0
    %667 = vmatpush.msra.mxu0 %v374
    %668 = vmatmul.f32.gmra.mxu0 %v641
    %v669 = vpop.f32.mrf.mxu0
    %v670 = vadd.f32 0.0, %v669
    %671 = vmatmul.f32.gmra.mxu0 %v644
    %v672 = vpop.f32.mrf.mxu0
    %v673 = vadd.f32 0.0, %v672
    %674 = vmatmul.f32.gmra.mxu0 %v647
    %v675 = vpop.f32.mrf.mxu0
    %v676 = vadd.f32 0.0, %v675
    %677 = vmatmul.f32.gmra.mxu0 %v650
    %v678 = vpop.f32.mrf.mxu0
    %v679 = vadd.f32 0.0, %v678
    %680 = vdwg.mxu0
    %v682 = vsel %vm177, %v636, 0
    %v685 = vsel %vm177, %v334, 0
    %v688 = vsel %vm177, %v335, 0
    %v691 = vsel %vm177, %v637, 0
    %693 = vmatpush.msra.mxu0 0.0
    %694 = vmatpush.msra.mxu0 0.0
    %695 = vmatpush.msra.mxu0 0.0
    %696 = vmatpush.msra.mxu0 0.0
    %697 = vmatpush.msra.mxu0 0.0
    %698 = vmatpush.msra.mxu0 0.0
    %699 = vmatpush.msra.mxu0 0.0
    %700 = vmatpush.msra.mxu0 0.0
    %701 = vmatpush.msra.mxu0 0.0
    %702 = vmatpush.msra.mxu0 0.0
    %703 = vmatpush.msra.mxu0 0.0
    %704 = vmatpush.msra.mxu0 0.0
    %705 = vmatpush.msra.mxu0 0.0
    %706 = vmatpush.msra.mxu0 0.0
    %707 = vmatpush.msra.mxu0 0.0
    %708 = vmatpush.msra.mxu0 %v372
    %709 = vmatmul.f32.gmra.mxu0 %v682
    %v710 = vpop.f32.mrf.mxu0
    %v711 = vadd.f32 %v670, %v710
    %712 = vmatmul.f32.gmra.mxu0 %v685
    %v713 = vpop.f32.mrf.mxu0
    %v714 = vadd.f32 %v673, %v713
    %715 = vmatmul.f32.gmra.mxu0 %v688
    %v716 = vpop.f32.mrf.mxu0
    %v717 = vadd.f32 %v676, %v716
    %718 = vmatmul.f32.gmra.mxu0 %v691
    %v719 = vpop.f32.mrf.mxu0
    %v720 = vadd.f32 %v679, %v719
    %721 = vdwg.mxu0
    %v722 = vrot.slane %v636, 1
    %v723 = vrot.slane %v334, 1
    %v724 = vsel %vm69, %v722, %v723
    %v725 = vrot.slane %v335, 1
    %v726 = vsel %vm69, %v723, %v725
    %v727 = vrot.slane %v637, 1
    %v728 = vsel %vm69, %v725, %v727
    %v729 = vsel %vm177, %v724, 0
    %v731 = vsel %vm177, %v726, 0
    %v733 = vsel %vm177, %v728, 0
    %v735 = vsel %vm177, %v727, 0
    %737 = vmatpush.msra.mxu0 0.0
    %738 = vmatpush.msra.mxu0 0.0
    %739 = vmatpush.msra.mxu0 0.0
    %740 = vmatpush.msra.mxu0 0.0
    %741 = vmatpush.msra.mxu0 0.0
    %742 = vmatpush.msra.mxu0 0.0
    %743 = vmatpush.msra.mxu0 0.0
    %744 = vmatpush.msra.mxu0 0.0
    %745 = vmatpush.msra.mxu0 0.0
    %746 = vmatpush.msra.mxu0 0.0
    %747 = vmatpush.msra.mxu0 0.0
    %748 = vmatpush.msra.mxu0 0.0
    %749 = vmatpush.msra.mxu0 0.0
    %750 = vmatpush.msra.mxu0 0.0
    %751 = vmatpush.msra.mxu0 0.0
    %752 = vmatpush.msra.mxu0 %v376
    %753 = vmatmul.f32.gmra.mxu0 %v729
    %v754 = vpop.f32.mrf.mxu0
    %v755 = vadd.f32 0.0, %v754
    %756 = vmatmul.f32.gmra.mxu0 %v731
    %v757 = vpop.f32.mrf.mxu0
    %v758 = vadd.f32 0.0, %v757
    %759 = vmatmul.f32.gmra.mxu0 %v733
    %v760 = vpop.f32.mrf.mxu0
    %v761 = vadd.f32 0.0, %v760
    %762 = vmatmul.f32.gmra.mxu0 %v735
    %v763 = vpop.f32.mrf.mxu0
    %v764 = vadd.f32 0.0, %v763
    %765 = vdwg.mxu0
    %v766 = vadd.f32 %v711, %v755
    %v767 = vadd.f32 %v714, %v758
    %v768 = vadd.f32 %v717, %v761
    %v769 = vadd.f32 %v720, %v764
    %v770 = vrot.slane %v638, 1
    %v771 = vrot.slane %v369, 1
    %v772 = vsel %vm69, %v770, %v771
    %v773 = vrot.slane %v370, 1
    %v774 = vsel %vm69, %v771, %v773
    %v775 = vrot.slane %v639, 1
    %v776 = vsel %vm69, %v773, %v775
    %v777 = vsel %vm177, %v772, 0
    %v779 = vsel %vm177, %v774, 0
    %v781 = vsel %vm177, %v776, 0
    %v783 = vsel %vm177, %v775, 0
    %785 = vmatpush.msra.mxu0 0.0
    %786 = vmatpush.msra.mxu0 0.0
    %787 = vmatpush.msra.mxu0 0.0
    %788 = vmatpush.msra.mxu0 0.0
    %789 = vmatpush.msra.mxu0 0.0
    %790 = vmatpush.msra.mxu0 0.0
    %791 = vmatpush.msra.mxu0 0.0
    %792 = vmatpush.msra.mxu0 0.0
    %793 = vmatpush.msra.mxu0 0.0
    %794 = vmatpush.msra.mxu0 0.0
    %795 = vmatpush.msra.mxu0 0.0
    %796 = vmatpush.msra.mxu0 0.0
    %797 = vmatpush.msra.mxu0 0.0
    %798 = vmatpush.msra.mxu0 0.0
    %799 = vmatpush.msra.mxu0 0.0
    %800 = vmatpush.msra.mxu0 %v378
    %801 = vmatmul.f32.gmra.mxu0 %v777
    %v802 = vpop.f32.mrf.mxu0
    %v803 = vadd.f32 0.0, %v802
    %804 = vmatmul.f32.gmra.mxu0 %v779
    %v805 = vpop.f32.mrf.mxu0
    %v806 = vadd.f32 0.0, %v805
    %807 = vmatmul.f32.gmra.mxu0 %v781
    %v808 = vpop.f32.mrf.mxu0
    %v809 = vadd.f32 0.0, %v808
    %810 = vmatmul.f32.gmra.mxu0 %v783
    %v811 = vpop.f32.mrf.mxu0
    %v812 = vadd.f32 0.0, %v811
    %813 = vdwg.mxu0
    %v814 = vadd.f32 %v766, %v803
    %v815 = vadd.f32 %v767, %v806
    %v816 = vadd.f32 %v768, %v809
    %v817 = vadd.f32 %v769, %v812
    %v818 = vrot.slane %v636, 2
    %v819 = vrot.slane %v334, 2
    %v820 = vsel %vm587, %v818, %v819
    %v821 = vrot.slane %v335, 2
    %v822 = vsel %vm587, %v819, %v821
    %v823 = vrot.slane %v637, 2
    %v824 = vsel %vm587, %v821, %v823
    %v825 = vsel %vm177, %v820, 0
    %v827 = vsel %vm177, %v822, 0
    %v829 = vsel %vm177, %v824, 0
    %v831 = vsel %vm177, %v823, 0
    %833 = vmatpush.msra.mxu0 0.0
    %834 = vmatpush.msra.mxu0 0.0
    %835 = vmatpush.msra.mxu0 0.0
    %836 = vmatpush.msra.mxu0 0.0
    %837 = vmatpush.msra.mxu0 0.0
    %838 = vmatpush.msra.mxu0 0.0
    %839 = vmatpush.msra.mxu0 0.0
    %840 = vmatpush.msra.mxu0 0.0
    %841 = vmatpush.msra.mxu0 0.0
    %842 = vmatpush.msra.mxu0 0.0
    %843 = vmatpush.msra.mxu0 0.0
    %844 = vmatpush.msra.mxu0 0.0
    %845 = vmatpush.msra.mxu0 0.0
    %846 = vmatpush.msra.mxu0 0.0
    %847 = vmatpush.msra.mxu0 0.0
    %848 = vmatpush.msra.mxu0 %v380
    %849 = vmatmul.f32.gmra.mxu0 %v825
    %v850 = vpop.f32.mrf.mxu0
    %v851 = vadd.f32 0.0, %v850
    %852 = vmatmul.f32.gmra.mxu0 %v827
    %v853 = vpop.f32.mrf.mxu0
    %v854 = vadd.f32 0.0, %v853
    %855 = vmatmul.f32.gmra.mxu0 %v829
    %v856 = vpop.f32.mrf.mxu0
    %v857 = vadd.f32 0.0, %v856
    %858 = vmatmul.f32.gmra.mxu0 %v831
    %v859 = vpop.f32.mrf.mxu0
    %v860 = vadd.f32 0.0, %v859
    %861 = vdwg.mxu0
    %v862 = vadd.f32 %v814, %v851
    %v863 = vadd.f32 %v815, %v854
    %v864 = vadd.f32 %v816, %v857
    %v865 = vadd.f32 %v817, %v860
    %vm866 = vcmask 130048
    %v867 = vsel %vm866, %v632, 0.0
    %v868 = vsel %vm866, %v633, 0.0
    %v869 = vadd.f32 %v867, %v868
    %v870 = vsel %vm866, %v634, 0.0
    %v871 = vadd.f32 %v869, %v870
    %vm872 = vcmask 122880
    %v873 = vsel %vm872, %v635, 0.0
    %v874 = vadd.f32 %v871, %v873
    %v875 = vrot.slane %v874, 4
    %v876 = vadd.f32 %v874, %v875
    %v877 = vrot.slane %v876, 2
    %v878 = vadd.f32 %v876, %v877
    %v879 = vrot.slane %v878, 1
    %v880 = vadd.f32 %v878, %v879
    %v881 = vadd.f32 %v880, 0.0
    %v882 = vmul.f32 %v632, %v632
    %v883 = vmul.f32 %v633, %v633
    %v884 = vmul.f32 %v634, %v634
    %v885 = vmul.f32 %v635, %v635
    %v886 = vsel %vm866, %v882, 0.0
    %v887 = vsel %vm866, %v883, 0.0
    %v888 = vadd.f32 %v886, %v887
    %v889 = vsel %vm866, %v884, 0.0
    %v890 = vadd.f32 %v888, %v889
    %v891 = vsel %vm872, %v885, 0.0
    %v892 = vadd.f32 %v890, %v891
    %v893 = vrot.slane %v892, 4
    %v894 = vadd.f32 %v892, %v893
    %v895 = vrot.slane %v894, 2
    %v896 = vadd.f32 %v894, %v895
    %v897 = vrot.slane %v896, 1
    %v898 = vadd.f32 %v896, %v897
    %v899 = vadd.f32 %v898, 0.0
    %v900 = vsel %vm866, %v862, 0.0
    %v901 = vsel %vm866, %v863, 0.0
    %v902 = vadd.f32 %v900, %v901
    %v903 = vsel %vm866, %v864, 0.0
    %v904 = vadd.f32 %v902, %v903
    %v905 = vsel %vm872, %v865, 0.0
    %v906 = vadd.f32 %v904, %v905
    %v907 = vrot.slane %v906, 4
    %v908 = vadd.f32 %v906, %v907
    %v909 = vrot.slane %v908, 2
    %v910 = vadd.f32 %v908, %v909
    %v911 = vrot.slane %v910, 1
    %v912 = vadd.f32 %v910, %v911
    %v913 = vadd.f32 %v881, %v912
    %v914 = vmul.f32 %v862, %v862
    %v915 = vmul.f32 %v863, %v863
    %v916 = vmul.f32 %v864, %v864
    %v917 = vmul.f32 %v865, %v865
    %v918 = vsel %vm866, %v914, 0.0
    %v919 = vsel %vm866, %v915, 0.0
    %v920 = vadd.f32 %v918, %v919
    %v921 = vsel %vm866, %v916, 0.0
    %v922 = vadd.f32 %v920, %v921
    %v923 = vsel %vm872, %v917, 0.0
    %v924 = vadd.f32 %v922, %v923
    %v925 = vrot.slane %v924, 4
    %v926 = vadd.f32 %v924, %v925
    %v927 = vrot.slane %v926, 2
    %v928 = vadd.f32 %v926, %v927
    %v929 = vrot.slane %v928, 1
    %v930 = vadd.f32 %v928, %v929
    %v931 = vadd.f32 %v899, %v930
    %v932 = vrcp.pop 50.0
    %v933 = vmul.f32 50.0, %v932
    %v934 = vsub.f32 1.0, %v933
    %v935 = vmul.f32 %v932, %v934
    %v936 = vadd.f32 %v932, %v935
    %vm937 = vweird.f32 %v932
    %v938 = vsel %vm937, %v932, %v936
    %v939 = vmul.f32 %v913, %v938
    %v940 = vmul.f32 %v931, %v938
    %v941 = vmul.f32 %v939, %v939
    %v942 = vsub.f32 %v940, %v941
    %v943 = vadd.f32 %v942, 1e-05
    %v944 = vrsqrt.pop %v943
    %v945 = vmul.f32 %v944, %v943
    %v946 = vmul.f32 %v945, %v944
    %v947 = vmul.f32 0.5, %v946
    %v948 = vsub.f32 1.5, %v947
    %v949 = vmul.f32 %v944, %v948
    %vm950 = vweird.f32 %v943
    %vm951 = vweird.f32 %v944
    %vm952 = vmor %vm950, %vm951
    %v953 = vsel %vm952, %v944, %v949
    %v954 = vld [vmem:[%s6] sm:$0x1]
    %v955 = vmul.f32 %v953, %v954
    %v956 = vld [vmem:[%s7] sm:$0x1]
    %v957 = vmul.f32 %v939, %v955
    %v958 = vsub.f32 %v956, %v957
    %v959 = vld [vmem:[%s8] sm:$0xff]
    %v960 = vld [vmem:[%s8 + $0x8] sm:$0xff]
    %v961 = vld [vmem:[%s8 + $0x10] sm:$0xff]
    %v962 = vld [vmem:[%s8 + $0x18] sm:$0x1]
    %s963 = scalar_lea.vmem %s8, 32
    %v964 = vld [vmem:[%s963] sm:$0xff]
    %v965 = vld [vmem:[%s963 + $0x8] sm:$0xff]
    %v966 = vld [vmem:[%s963 + $0x10] sm:$0xff]
    %v967 = vld [vmem:[%s963 + $0x18] sm:$0x1]
    %v968 = vperm.slane %v955, 0
    %v969 = vmul.f32 %v632, %v968
    %v970 = vmul.f32 %v633, %v968
    %v971 = vmul.f32 %v634, %v968
    %v972 = vmul.f32 %v635, %v968
    %v974 = vperm.slane %v958, 0
    %v976 = vadd.f32 %v969, %v974
    %v977 = vadd.f32 %v970, %v974
    %v978 = vadd.f32 %v971, %v974
    %v979 = vadd.f32 %v972, %v974
    %vm980 = vcmp.gt.f32.partialorder %v976, 1.0
    %vm981 = vcmp.gt.f32.partialorder %v977, 1.0
    %vm982 = vcmp.gt.f32.partialorder %v978, 1.0
    %vm983 = vcmp.gt.f32.partialorder %v979, 1.0
    %v984 = vsel %vm980, 1, 0
    %v985 = vsel %vm981, 1, 0
    %v986 = vsel %vm982, 1, 0
    %v987 = vsel %vm983, 1, 0
    %v988 = vcvt.s32.f32 %v984
    %v989 = vcvt.s32.f32 %v985
    %v990 = vcvt.s32.f32 %v986
    %v991 = vcvt.s32.f32 %v987
    %v992 = vmul.f32 %v988, %v959
    %v993 = vmul.f32 %v989, %v960
    %v994 = vmul.f32 %v990, %v961
    %v995 = vmul.f32 %v991, %v962
    %v996 = vsel %vm866, %v992, 0.0
    %v997 = vsel %vm866, %v993, 0.0
    %v998 = vadd.f32 %v996, %v997
    %v999 = vsel %vm866, %v994, 0.0
    %v1000 = vadd.f32 %v998, %v999
    %v1001 = vsel %vm872, %v995, 0.0
    %v1002 = vadd.f32 %v1000, %v1001
    %1003 = vadd.xlane.f32.xlu0 %v1002
    %v1004 = vpop.xlane.xlu0 %1003
    %v1005 = vrot.slane %v1004, 4
    %v1006 = vadd.f32 %v1004, %v1005
    %v1007 = vrot.slane %v1006, 2
    %v1008 = vadd.f32 %v1006, %v1007
    %v1009 = vrot.slane %v1008, 1
    %v1010 = vadd.f32 %v1008, %v1009
    %s1011 = vtos %v1010
    %v1012 = vstv %s1011
    %v1013 = vmul.f32 %v988, %v964
    %v1014 = vmul.f32 %v989, %v965
    %v1015 = vmul.f32 %v990, %v966
    %v1016 = vmul.f32 %v991, %v967
    %v1017 = vsel %vm866, %v1013, 0.0
    %v1018 = vsel %vm866, %v1014, 0.0
    %v1019 = vadd.f32 %v1017, %v1018
    %v1020 = vsel %vm866, %v1015, 0.0
    %v1021 = vadd.f32 %v1019, %v1020
    %v1022 = vsel %vm872, %v1016, 0.0
    %v1023 = vadd.f32 %v1021, %v1022
    %1024 = vadd.xlane.f32.xlu0 %v1023
    %v1025 = vpop.xlane.xlu0 %1024
    %v1026 = vrot.slane %v1025, 4
    %v1027 = vadd.f32 %v1025, %v1026
    %v1028 = vrot.slane %v1027, 2
    %v1029 = vadd.f32 %v1027, %v1028
    %v1030 = vrot.slane %v1029, 1
    %v1031 = vadd.f32 %v1029, %v1030
    %s1032 = vtos %v1031
    %v1033 = vstv %s1032
    %vm1034 = vcmask 7168
    %v1035 = vsel %vm1034, %v1012, %v1033
    %v1036 = vmul.f32 %v862, %v968
    %v1037 = vmul.f32 %v863, %v968
    %v1038 = vmul.f32 %v864, %v968
    %v1039 = vmul.f32 %v865, %v968
    %v1040 = vadd.f32 %v1036, %v974
    %v1041 = vadd.f32 %v1037, %v974
    %v1042 = vadd.f32 %v1038, %v974
    %v1043 = vadd.f32 %v1039, %v974
    %vm1044 = vcmp.gt.f32.partialorder %v1040, 1.0
    %vm1045 = vcmp.gt.f32.partialorder %v1041, 1.0
    %vm1046 = vcmp.gt.f32.partialorder %v1042, 1.0
    %vm1047 = vcmp.gt.f32.partialorder %v1043, 1.0
    %v1048 = vsel %vm1044, 1, 0
    %v1049 = vsel %vm1045, 1, 0
    %v1050 = vsel %vm1046, 1, 0
    %v1051 = vsel %vm1047, 1, 0
    %v1052 = vcvt.s32.f32 %v1048
    %v1053 = vcvt.s32.f32 %v1049
    %v1054 = vcvt.s32.f32 %v1050
    %v1055 = vcvt.s32.f32 %v1051
    %v1056 = vmul.f32 %v1052, %v959
    %v1057 = vmul.f32 %v1053, %v960
    %v1058 = vmul.f32 %v1054, %v961
    %v1059 = vmul.f32 %v1055, %v962
    %v1060 = vsel %vm866, %v1056, 0.0
    %v1061 = vsel %vm866, %v1057, 0.0
    %v1062 = vadd.f32 %v1060, %v1061
    %v1063 = vsel %vm866, %v1058, 0.0
    %v1064 = vadd.f32 %v1062, %v1063
    %v1065 = vsel %vm872, %v1059, 0.0
    %v1066 = vadd.f32 %v1064, %v1065
    %1067 = vadd.xlane.f32.xlu0 %v1066
    %v1068 = vpop.xlane.xlu0 %1067
    %v1069 = vrot.slane %v1068, 4
    %v1070 = vadd.f32 %v1068, %v1069
    %v1071 = vrot.slane %v1070, 2
    %v1072 = vadd.f32 %v1070, %v1071
    %v1073 = vrot.slane %v1072, 1
    %v1074 = vadd.f32 %v1072, %v1073
    %s1075 = vtos %v1074
    %v1076 = vstv %s1075
    %v1077 = vmul.f32 %v1052, %v964
    %v1078 = vmul.f32 %v1053, %v965
    %v1079 = vmul.f32 %v1054, %v966
    %v1080 = vmul.f32 %v1055, %v967
    %v1081 = vsel %vm866, %v1077, 0.0
    %v1082 = vsel %vm866, %v1078, 0.0
    %v1083 = vadd.f32 %v1081, %v1082
    %v1084 = vsel %vm866, %v1079, 0.0
    %v1085 = vadd.f32 %v1083, %v1084
    %v1086 = vsel %vm872, %v1080, 0.0
    %v1087 = vadd.f32 %v1085, %v1086
    %1088 = vadd.xlane.f32.xlu0 %v1087
    %v1089 = vpop.xlane.xlu0 %1088
    %v1090 = vrot.slane %v1089, 4
    %v1091 = vadd.f32 %v1089, %v1090
    %v1092 = vrot.slane %v1091, 2
    %v1093 = vadd.f32 %v1091, %v1092
    %v1094 = vrot.slane %v1093, 1
    %v1095 = vadd.f32 %v1093, %v1094
    %s1096 = vtos %v1095
    %v1097 = vstv %s1096
    %v1098 = vsel %vm1034, %v1076, %v1097
    %v1100 = vrot.slane %v1098, 7
    %v1102 = vsel %vm385, %v1035, %v1100
    %v1103 = vld [vmem:[%s9] sm:$0x1]
    %v1105 = vperm.slane %v1103, 0
    %v1107 = vadd.f32 %v1102, %v1105
    %vm1108 = vcmask 9216
    %1109 = vst.msk [vmem:[#allocation4] sm:$0x3] %vm1108, %v1107
    %vm1110 = vcmp.gt.f32.partialorder %v1107, 1.0
    %v1111 = vsel %vm1110, 1, 0
    %v1112 = vcvt.s32.f32 %v1111
    %1113 = vst.msk [vmem:[#allocation2] sm:$0x3] %vm1108, %v1112
    // Predicated region
    $region42: #{spiking_densenet_forward.1} parent=1 // pred_check
      _
    $region43: #{spiking_densenet_forward.1} parent=1 // pred_check_branch
      %1115 = sbr.rel (0) target = $region45
    $region44: #{spiking_densenet_forward.1} parent=1 // pred_region
      %1117 = vsyncadd [#allocation3], 0
      %s1119 = sshll.u32 [#allocation2], 4
      %s1120 = int_to_ptr.vmem [resolvable:$true] %s1119
      %s1121 = sshll.u32 %s10, 4
      %s1122 = int_to_ptr.hbm [resolvable:$true] %s1121
      %1124 = dma.vmem_to_hbm [thread:$0]  %s1120, 32, %s1122, [#allocation3]
    $region45: #{spiking_densenet_forward.1} parent=1 // pred_fallthru
      _
    // Predicated region
    $region46: #{spiking_densenet_forward.1} parent=1 // pred_check
      _
    $region47: #{spiking_densenet_forward.1} parent=1 // pred_check_branch
      %1126 = sbr.rel (0) target = $region49
    $region48: #{spiking_densenet_forward.1} parent=1 // pred_region
      %1128 = vsyncadd [#allocation5], 0
      %s1130 = sshll.u32 [#allocation4], 4
      %s1131 = int_to_ptr.vmem [resolvable:$true] %s1130
      %s1132 = sshll.u32 %s11, 4
      %s1133 = int_to_ptr.hbm [resolvable:$true] %s1132
      %1135 = dma.vmem_to_hbm [thread:$0]  %s1131, 32, %s1133, [#allocation5]
    $region49: #{spiking_densenet_forward.1} parent=1 // pred_fallthru
      _
    // Predicated region
    $region50: #{spiking_densenet_forward.1} parent=1 // pred_check
      _
    $region51: #{spiking_densenet_forward.1} parent=1 // pred_check_branch
      %1137 = sbr.rel (0) target = $region53
    $region52: #{spiking_densenet_forward.1} parent=1 // pred_region
      %1139 = dma.done [#allocation3], 32
    $region53: #{spiking_densenet_forward.1} parent=1 // pred_fallthru
      _
    // Predicated region
    $region54: #{spiking_densenet_forward.1} parent=1 // pred_check
      _
    $region55: #{spiking_densenet_forward.1} parent=1 // pred_check_branch
      %1141 = sbr.rel (0) target = $region57
    $region56: #{spiking_densenet_forward.1} parent=1 // pred_region
      %1143 = dma.done [#allocation5], 32
    $region57: #{spiking_densenet_forward.1} parent=1 // pred_fallthru
      _
    %1144 = vsyncpa [#allocation3], 1
    %1145 = vsyncpa [#allocation5], 1

</llo_original>
